<compile_context>
chip_gen: v7x
topology: tpu7x:2x2x1
jax: 0.10.0
libtpu: 0.0.40
codegen_flags: <defaults>
</compile_context>

<pallas_src>
import functools

import jax
import jax.numpy as jnp
from jax.experimental import pallas as pl
from jax.experimental.pallas import tpu as pltpu


def _drl_kernel(xp_ref, m_ref, pm_ref, nm_ref, w_ref, b_ref, o_ref, stk_ref,
                *, dilation):
    """One (C, L) slab: fused dilated conv + folded BN + ReLU + residual + mask."""
    d = dilation
    C, L = o_ref.shape

    x = xp_ref[:, d:d + L]                                   # x(t), (C, L)

    # Stacked K=3C operand [x(t-d); x(t); x(t+d)].  The padded slab supplies
    # the shifted windows; pm/nm zero the conv padding positions and block
    # cross-sequence leakage across the batch-folded lane axis.
    stk_ref[0:C, :] = xp_ref[:, 0:L] * pm_ref[...]           # x(t-d)
    stk_ref[C:2 * C, :] = x                                  # x(t)
    stk_ref[2 * C:3 * C, :] = xp_ref[:, 2 * d:2 * d + L] * nm_ref[...]  # x(t+d)

    # Single MXU matmul; BN scale and all biases are pre-folded into w/b.
    conv = jnp.dot(w_ref[...], stk_ref[...],
                   preferred_element_type=jnp.float32) + b_ref[...]

    out = jnp.maximum(conv, 0.0) + x                         # ReLU + residual
    o_ref[...] = (out * m_ref[...]).astype(o_ref.dtype)      # * mask[:, 0:1, :]


def _pick_group(n, t, max_lanes=4096):
    """Largest divisor of n whose folded lane width g*t stays <= max_lanes."""
    g = 1
    for cand in range(1, n + 1):
        if n % cand == 0 and cand * t <= max_lanes:
            g = cand
    return g


def dilated_residual_layer(x, mask, params, dilation, eps=1e-5):
    """x: (N, C, T), mask: (N, Cm, T) (only channel 0 used). Returns (N, C, T)."""
    N, C, T = x.shape
    d = int(dilation)
    assert 0 < d < T, "dilation must satisfy 0 < dilation < T"
    w, b = params["w"], params["b"]                          # (C, C, 3), (C,)
    gamma, beta = params["gamma"], params["beta"]
    mean, var = params["mean"], params["var"]
    assert w.shape == (C, C, 3)

    # ---- Fold eval-mode BN + biases into the conv weights (O(C^2), one-time).
    scale = gamma / jnp.sqrt(var + eps)                      # (C,)
    w_f = w * scale[:, None, None]                           # row-scale output ch.
    b_f = b * scale + beta - mean * scale                    # (C,)
    # Stacked (C, 3C) weight matching the stacked operand [x(t-d); x(t); x(t+d)].
    w_stk = jnp.concatenate([w_f[:, :, 0], w_f[:, :, 1], w_f[:, :, 2]], axis=1)
    b_col = b_f[:, None]                                     # (C, 1)

    # ---- Fold batch into the lane axis: (N, C, T) -> (N/G, C, G*T) slabs.
    G = _pick_group(N, T)
    NG, L = N // G, G * T
    x_slab = x.reshape(NG, G, C, T).transpose(0, 2, 1, 3).reshape(NG, C, L)
    xp_slab = jnp.pad(x_slab, ((0, 0), (0, 0), (d, d)))      # d-lane zero halo
    m_slab = (mask[:, 0:1, :].reshape(NG, G, 1, T)
              .transpose(0, 2, 1, 3).reshape(NG, 1, L))

    # Per-lane validity of the +/-d taps (zero-padded conv + no cross-sequence
    # leakage); built once on the host side, tiny (1, L) f32 arrays.
    t_seq = jnp.tile(jnp.arange(T, dtype=jnp.int32), G)[None, :]
    pm = (t_seq >= d).astype(x.dtype)                        # tap @ t-d valid
    nm = (t_seq < T - d).astype(x.dtype)                     # tap @ t+d valid

    kernel = functools.partial(_drl_kernel, dilation=d)
    out_slab = pl.pallas_call(
        kernel,
        out_shape=jax.ShapeDtypeStruct((NG, C, L), x.dtype),
        grid_spec=pltpu.PrefetchScalarGridSpec(
            num_scalar_prefetch=0,
            grid=(NG,),
            in_specs=[
                pl.BlockSpec((None, C, L + 2 * d), lambda g: (g, 0, 0)),  # padded x
                pl.BlockSpec((None, 1, L), lambda g: (g, 0, 0)),          # seq mask
                pl.BlockSpec((1, L), lambda g: (0, 0)),                   # prev-tap mask
                pl.BlockSpec((1, L), lambda g: (0, 0)),                   # next-tap mask
                pl.BlockSpec((C, 3 * C), lambda g: (0, 0)),               # stacked W
                pl.BlockSpec((C, 1), lambda g: (0, 0)),                   # folded bias
            ],
            out_specs=pl.BlockSpec((None, C, L), lambda g: (g, 0, 0)),
            scratch_shapes=[pltpu.VMEM((3 * C, L), jnp.float32)],
        ),
        compiler_params=pltpu.CompilerParams(
            dimension_semantics=("parallel",)),
    )(xp_slab, m_slab, pm, nm, w_stk, b_col)

    return out_slab.reshape(NG, C, G, T).transpose(0, 2, 1, 3).reshape(N, C, T)


def reference(x, mask, params, dilation, eps=1e-5):
    """Pure-JAX reference (unfolded BN) for correctness checking."""
    w, b = params["w"], params["b"]
    gamma, beta = params["gamma"], params["beta"]
    mean, var = params["mean"], params["var"]
    N, C, T = x.shape
    d = dilation
    xp = jnp.pad(x, ((0, 0), (0, 0), (d, d)))
    conv = (jnp.einsum("oc,nct->not", w[:, :, 0], xp[:, :, 0:T])
            + jnp.einsum("oc,nct->not", w[:, :, 1], x)
            + jnp.einsum("oc,nct->not", w[:, :, 2], xp[:, :, 2 * d:2 * d + T])
            + b[None, :, None])
    bn = ((conv - mean[None, :, None]) / jnp.sqrt(var[None, :, None] + eps)
          * gamma[None, :, None] + beta[None, :, None])
    out = jnp.maximum(bn, 0.0) + x
    return out * mask[:, 0:1, :]


if __name__ == "__main__":
    # Small shapes consistent with DilatedResidualLayer(dilation, C, C)
    # applied to x: (N, C, T) with a per-sequence mask.
    N, C, T = 2, 16, 32
    dilation = 2

    key = jax.random.PRNGKey(0)
    kx, kw, kb, kg, kbt, km, kv = jax.random.split(key, 7)

    x = jax.random.normal(kx, (N, C, T), jnp.float32)
    mask = jnp.ones((N, 8, T), jnp.float32)          # only channel 0 is used
    mask = mask.at[1, :, 24:].set(0.0)               # ragged second sequence

    params = dict(
        w=0.2 * jax.random.normal(kw, (C, C, 3), jnp.float32),
        b=0.1 * jax.random.normal(kb, (C,), jnp.float32),
        gamma=1.0 + 0.1 * jax.random.normal(kg, (C,), jnp.float32),
        beta=0.1 * jax.random.normal(kbt, (C,), jnp.float32),
        mean=0.1 * jax.random.normal(km, (C,), jnp.float32),
        var=1.0 + 0.5 * jax.random.uniform(kv, (C,), jnp.float32),
    )

    out = dilated_residual_layer(x, mask, params, dilation)
    out = jax.block_until_ready(out)

    ref = reference(x, mask, params, dilation)
    if not jnp.allclose(out, ref, atol=1e-4, rtol=1e-4):
        err = float(jnp.max(jnp.abs(out - ref)))
        raise AssertionError(f"Pallas kernel mismatch, max abs err = {err}")

    print("KERNEL_OK")
</pallas_src>

<mosaic_0001>
module attributes {stable_mosaic.version = 11 : i64} {
  func.func @_drl_kernel(%arg0: i32, %arg1: memref<1x16x68xf32, #tpu.memory_space<vmem>>, %arg2: memref<1x1x64xf32, #tpu.memory_space<vmem>>, %arg3: memref<1x64xf32, #tpu.memory_space<vmem>>, %arg4: memref<1x64xf32, #tpu.memory_space<vmem>>, %arg5: memref<16x48xf32, #tpu.memory_space<vmem>>, %arg6: memref<16x1xf32, #tpu.memory_space<vmem>>, %arg7: memref<1x16x64xf32, #tpu.memory_space<vmem>>, %arg8: memref<48x64xf32, #tpu.memory_space<vmem>>) attributes {dimension_semantics = [#tpu.dimension_semantics<parallel>], iteration_bounds = array<i64: 1>, scalar_prefetch = 0 : i64, scratch_operands = 1 : i64, tpu.core_type = #tpu.core_type<tc>, window_params = [{transform_indices = @transform_0, window_bounds = array<i64: 1, 16, 68>}, {transform_indices = @transform_1, window_bounds = array<i64: 1, 1, 64>}, {pipeline_mode = #tpu.pipeline_mode<synchronous>, transform_indices = @transform_2, window_bounds = array<i64: 1, 64>}, {pipeline_mode = #tpu.pipeline_mode<synchronous>, transform_indices = @transform_3, window_bounds = array<i64: 1, 64>}, {pipeline_mode = #tpu.pipeline_mode<synchronous>, transform_indices = @transform_4, window_bounds = array<i64: 16, 48>}, {pipeline_mode = #tpu.pipeline_mode<synchronous>, transform_indices = @transform_5, window_bounds = array<i64: 16, 1>}, {transform_indices = @transform_6, window_bounds = array<i64: 1, 16, 64>}]} {
    %c0 = arith.constant 0 : index
    %c0_0 = arith.constant 0 : index
    %c2 = arith.constant 2 : index
    %0 = vector.load %arg1[%c0, %c0_0, %c2] : memref<1x16x68xf32, #tpu.memory_space<vmem>>, vector<1x16x64xf32>
    %1 = vector.shape_cast %0 : vector<1x16x64xf32> to vector<16x64xf32>
    %c0_1 = arith.constant 0 : index
    %c0_2 = arith.constant 0 : index
    %c0_3 = arith.constant 0 : index
    %2 = vector.load %arg1[%c0_1, %c0_2, %c0_3] : memref<1x16x68xf32, #tpu.memory_space<vmem>>, vector<1x16x64xf32>
    %3 = vector.shape_cast %2 : vector<1x16x64xf32> to vector<16x64xf32>
    %c0_4 = arith.constant 0 : index
    %c0_5 = arith.constant 0 : index
    %4 = vector.load %arg3[%c0_4, %c0_5] : memref<1x64xf32, #tpu.memory_space<vmem>>, vector<1x64xf32>
    %5 = vector.broadcast %4 : vector<1x64xf32> to vector<16x64xf32>
    %6 = arith.mulf %3, %5 : vector<16x64xf32>
    %c0_6 = arith.constant 0 : index
    %c0_7 = arith.constant 0 : index
    %7 = vector.load %arg8[%c0_6, %c0_7] : memref<48x64xf32, #tpu.memory_space<vmem>>, vector<16x64xf32>
    tpu.vector_store %arg8[%c0_6, %c0_7], %6 {strides = array<i32>} : memref<48x64xf32, #tpu.memory_space<vmem>>, vector<16x64xf32>,
    %c16 = arith.constant 16 : index
    %c0_8 = arith.constant 0 : index
    %8 = vector.load %arg8[%c16, %c0_8] : memref<48x64xf32, #tpu.memory_space<vmem>>, vector<16x64xf32>
    tpu.vector_store %arg8[%c16, %c0_8], %1 {strides = array<i32>} : memref<48x64xf32, #tpu.memory_space<vmem>>, vector<16x64xf32>,
    %c0_9 = arith.constant 0 : index
    %c0_10 = arith.constant 0 : index
    %c4 = arith.constant 4 : index
    %9 = vector.load %arg1[%c0_9, %c0_10, %c4] : memref<1x16x68xf32, #tpu.memory_space<vmem>>, vector<1x16x64xf32>
    %10 = vector.shape_cast %9 : vector<1x16x64xf32> to vector<16x64xf32>
    %c0_11 = arith.constant 0 : index
    %c0_12 = arith.constant 0 : index
    %11 = vector.load %arg4[%c0_11, %c0_12] : memref<1x64xf32, #tpu.memory_space<vmem>>, vector<1x64xf32>
    %12 = vector.broadcast %11 : vector<1x64xf32> to vector<16x64xf32>
    %13 = arith.mulf %10, %12 : vector<16x64xf32>
    %c32 = arith.constant 32 : index
    %c0_13 = arith.constant 0 : index
    %14 = vector.load %arg8[%c32, %c0_13] : memref<48x64xf32, #tpu.memory_space<vmem>>, vector<16x64xf32>
    tpu.vector_store %arg8[%c32, %c0_13], %13 {strides = array<i32>} : memref<48x64xf32, #tpu.memory_space<vmem>>, vector<16x64xf32>,
    %c0_14 = arith.constant 0 : index
    %c0_15 = arith.constant 0 : index
    %15 = vector.load %arg5[%c0_14, %c0_15] : memref<16x48xf32, #tpu.memory_space<vmem>>, vector<16x48xf32>
    %c0_16 = arith.constant 0 : index
    %c0_17 = arith.constant 0 : index
    %16 = vector.load %arg8[%c0_16, %c0_17] : memref<48x64xf32, #tpu.memory_space<vmem>>, vector<48x64xf32>
    %cst = arith.constant dense<0.000000e+00> : vector<16x64xf32>
    %17 = tpu.matmul %15, %16, %cst {dimension_numbers = #tpu.dot_dimension_numbers<[1], [0], [0], [1], [0, 0, 1, 1], [], []>} : vector<16x48xf32>, vector<48x64xf32>, vector<16x64xf32> -> vector<16x64xf32>
    %c0_18 = arith.constant 0 : index
    %c0_19 = arith.constant 0 : index
    %18 = vector.load %arg6[%c0_18, %c0_19] : memref<16x1xf32, #tpu.memory_space<vmem>>, vector<16x1xf32>
    %19 = vector.broadcast %18 : vector<16x1xf32> to vector<16x64xf32>
    %20 = arith.addf %17, %19 : vector<16x64xf32>
    %cst_20 = arith.constant 0.000000e+00 : f32
    %21 = vector.broadcast %cst_20 : f32 to vector<16x64xf32>
    %22 = arith.maximumf %20, %21 : vector<16x64xf32>
    %23 = arith.addf %22, %1 : vector<16x64xf32>
    %c0_21 = arith.constant 0 : index
    %c0_22 = arith.constant 0 : index
    %c0_23 = arith.constant 0 : index
    %24 = vector.load %arg2[%c0_21, %c0_22, %c0_23] : memref<1x1x64xf32, #tpu.memory_space<vmem>>, vector<1x1x64xf32>
    %25 = vector.shape_cast %24 : vector<1x1x64xf32> to vector<1x64xf32>
    %26 = vector.broadcast %25 : vector<1x64xf32> to vector<16x64xf32>
    %27 = arith.mulf %23, %26 : vector<16x64xf32>
    %c0_24 = arith.constant 0 : index
    %c0_25 = arith.constant 0 : index
    %c0_26 = arith.constant 0 : index
    %28 = vector.load %arg7[%c0_24, %c0_25, %c0_26] : memref<1x16x64xf32, #tpu.memory_space<vmem>>, vector<1x16x64xf32>
    %29 = vector.shape_cast %28 : vector<1x16x64xf32> to vector<16x64xf32>
    %30 = vector.shape_cast %27 : vector<16x64xf32> to vector<1x16x64xf32>
    tpu.vector_store %arg7[%c0_24, %c0_25, %c0_26], %30 {strides = array<i32>} : memref<1x16x64xf32, #tpu.memory_space<vmem>>, vector<1x16x64xf32>,
    return
  }
  func.func @transform_0(%arg0: i32) -> (i32, i32, i32) {
    %c0_i32 = arith.constant 0 : i32
    %c0_i32_0 = arith.constant 0 : i32
    %c0_i32_1 = arith.constant 0 : i32
    return %arg0, %c0_i32, %c0_i32_0 : i32, i32, i32
  }
  func.func @transform_1(%arg0: i32) -> (i32, i32, i32) {
    %c0_i32 = arith.constant 0 : i32
    %c0_i32_0 = arith.constant 0 : i32
    %c0_i32_1 = arith.constant 0 : i32
    return %arg0, %c0_i32, %c0_i32_0 : i32, i32, i32
  }
  func.func @transform_2(%arg0: i32) -> (i32, i32) {
    %c0_i32 = arith.constant 0 : i32
    %c0_i32_0 = arith.constant 0 : i32
    %c0_i32_1 = arith.constant 0 : i32
    return %c0_i32, %c0_i32_0 : i32, i32
  }
  func.func @transform_3(%arg0: i32) -> (i32, i32) {
    %c0_i32 = arith.constant 0 : i32
    %c0_i32_0 = arith.constant 0 : i32
    %c0_i32_1 = arith.constant 0 : i32
    return %c0_i32, %c0_i32_0 : i32, i32
  }
  func.func @transform_4(%arg0: i32) -> (i32, i32) {
    %c0_i32 = arith.constant 0 : i32
    %c0_i32_0 = arith.constant 0 : i32
    %c0_i32_1 = arith.constant 0 : i32
    return %c0_i32, %c0_i32_0 : i32, i32
  }
  func.func @transform_5(%arg0: i32) -> (i32, i32) {
    %c0_i32 = arith.constant 0 : i32
    %c0_i32_0 = arith.constant 0 : i32
    %c0_i32_1 = arith.constant 0 : i32
    return %c0_i32, %c0_i32_0 : i32, i32
  }
  func.func @transform_6(%arg0: i32) -> (i32, i32, i32) {
    %c0_i32 = arith.constant 0 : i32
    %c0_i32_0 = arith.constant 0 : i32
    %c0_i32_1 = arith.constant 0 : i32
    return %arg0, %c0_i32, %c0_i32_0 : i32, i32, i32
  }
}

</mosaic_0001>

<llo_original>
// kernel: tpu_custom_call.1
$region0: #{tpu_custom_call.1}
  #allocation0 [shape = 'u32[]', space=smem, size = 0x4, offset = 0x4, fixed_abs, tag = 'smem constant byte address 0x4 - core index']
  #allocation1 [shape = 'u32[144,128]{1,0:T(1,128)}', space=vmem, size = 0x12000, scoped, tag = 'internal scratch']
  #allocation2 [shape = 'f32[48,64]{1,0:T(8,128)}', space=vmem, size = 0x6000, scoped, tag = 'scratch operand']
  %s0 = inlined_call_operand.vmem [shape: f32[1,16,68], index: 0, kind: input, shape index: {}]
  %s1 = inlined_call_operand.hbm [shape: f32[1,1,64], index: 1, kind: input, shape index: {}]
  %s2 = inlined_call_operand.hbm [shape: f32[1,64], index: 2, kind: input, shape index: {}]
  %s3 = inlined_call_operand.hbm [shape: f32[1,64], index: 3, kind: input, shape index: {}]
  %s4 = inlined_call_operand.vmem [shape: f32[16,48], index: 4, kind: input, shape index: {}]
  %s5 = inlined_call_operand.vmem [shape: f32[16,1], index: 5, kind: input, shape index: {}]
  %s6 = inlined_call_operand.hbm [shape: f32[1,16,64], index: 6, kind: output, shape index: {}]
  %s7 = sld [smem:[#allocation0]]
  $region46: #{tpu_custom_call.1} parent=0
    _
  %s9 = ssub.s32 1, %s7
  %s10 = scalar_select 0, %s9, %s7
  $region1: #{tpu_custom_call.1} parent=0
    #allocation3 [shape = 'u8[512]{0}', space=vmem, size = 0x400, scoped, tag = 'input window, operand 1, single buffered']
    #allocation4 [shape = 's32[1]{0}', space=sflag, size = 0x4, scoped, tag = 'scoped memory for tpu_custom_call.1']
    #allocation5 [shape = 's32[1]{0}', space=sflag, size = 0x4, scoped, tag = 'scoped memory for tpu_custom_call.1']
    #allocation6 [shape = 'u8[512]{0}', space=vmem, size = 0x400, scoped, tag = 'input window, operand 2, single buffered']
    #allocation7 [shape = 's32[1]{0}', space=sflag, size = 0x4, scoped, tag = 'scoped memory for tpu_custom_call.1']
    #allocation8 [shape = 'u8[512]{0}', space=vmem, size = 0x400, scoped, tag = 'input window, operand 3, single buffered']
    #allocation9 [shape = 'u8[8192]{0}', space=vmem, size = 0x2000, scoped, tag = 'output window, operand 0, single buffered']
    %11 = vsyncpa [#allocation4], 0
    %12 = vsyncpa [#allocation7], 0
    %13 = vsyncpa [#allocation5], 0
    // Predicated region
    $region2: #{tpu_custom_call.1} parent=1 // pred_check
      _
    $region3: #{tpu_custom_call.1} parent=1 // pred_check_branch
      %15 = sbr.rel (0) target = $region5
    $region4: #{tpu_custom_call.1} parent=1 // pred_region
      _
    $region5: #{tpu_custom_call.1} parent=1 // pred_fallthru
      _
    // Predicated region
    $region6: #{tpu_custom_call.1} parent=1 // pred_check
      _
    $region7: #{tpu_custom_call.1} parent=1 // pred_check_branch
      %17 = sbr.rel (0) target = $region9
    $region8: #{tpu_custom_call.1} parent=1 // pred_region
      %s19 = ssub.s32 16, 16
      %20 = vsyncadd [#allocation4], %s19
      %s22 = sshll.u32 [#allocation3], 4
      %s23 = int_to_ptr.vmem [resolvable:$true] %s22
      %25 = dma.hbm_to_vmem [thread:$0]  %s1, 16, %s23, [#allocation4]
    $region9: #{tpu_custom_call.1} parent=1 // pred_fallthru
      _
    // Predicated region
    $region10: #{tpu_custom_call.1} parent=1 // pred_check
      _
    $region11: #{tpu_custom_call.1} parent=1 // pred_check_branch
      %27 = sbr.rel (0) target = $region13
    $region12: #{tpu_custom_call.1} parent=1 // pred_region
      %s29 = ssub.s32 16, 16
      %30 = vsyncadd [#allocation7], %s29
      %s32 = sshll.u32 [#allocation6], 4
      %s33 = int_to_ptr.vmem [resolvable:$true] %s32
      %35 = dma.hbm_to_vmem [thread:$0]  %s2, 16, %s33, [#allocation7]
    $region13: #{tpu_custom_call.1} parent=1 // pred_fallthru
      _
    // Predicated region
    $region14: #{tpu_custom_call.1} parent=1 // pred_check
      _
    $region15: #{tpu_custom_call.1} parent=1 // pred_check_branch
      %37 = sbr.rel (0) target = $region17
    $region16: #{tpu_custom_call.1} parent=1 // pred_region
      %s39 = ssub.s32 16, 16
      %40 = vsyncadd [#allocation7], %s39
      %s42 = sshll.u32 [#allocation8], 4
      %s43 = int_to_ptr.vmem [resolvable:$true] %s42
      %45 = dma.hbm_to_vmem [thread:$0]  %s3, 16, %s43, [#allocation7]
    $region17: #{tpu_custom_call.1} parent=1 // pred_fallthru
      _
    // Predicated region
    $region18: #{tpu_custom_call.1} parent=1 // pred_check
      _
    $region19: #{tpu_custom_call.1} parent=1 // pred_check_branch
      %47 = sbr.rel (0) target = $region21
    $region20: #{tpu_custom_call.1} parent=1 // pred_region
      _
    $region21: #{tpu_custom_call.1} parent=1 // pred_fallthru
      _
    // Predicated region
    $region22: #{tpu_custom_call.1} parent=1 // pred_check
      _
    $region23: #{tpu_custom_call.1} parent=1 // pred_check_branch
      %49 = sbr.rel (0) target = $region25
    $region24: #{tpu_custom_call.1} parent=1 // pred_region
      _
    $region25: #{tpu_custom_call.1} parent=1 // pred_fallthru
      _
    // Predicated region
    $region26: #{tpu_custom_call.1} parent=1 // pred_check
      _
    $region27: #{tpu_custom_call.1} parent=1 // pred_check_branch
      %51 = sbr.rel (0) target = $region29
    $region28: #{tpu_custom_call.1} parent=1 // pred_region
      %52 = dma.done [#allocation4], 16
    $region29: #{tpu_custom_call.1} parent=1 // pred_fallthru
      _
    // Predicated region
    $region30: #{tpu_custom_call.1} parent=1 // pred_check
      _
    $region31: #{tpu_custom_call.1} parent=1 // pred_check_branch
      %54 = sbr.rel (0) target = $region33
    $region32: #{tpu_custom_call.1} parent=1 // pred_region
      %55 = dma.done [#allocation7], 16
    $region33: #{tpu_custom_call.1} parent=1 // pred_fallthru
      _
    // Predicated region
    $region34: #{tpu_custom_call.1} parent=1 // pred_check
      _
    $region35: #{tpu_custom_call.1} parent=1 // pred_check_branch
      %57 = sbr.rel (0) target = $region37
    $region36: #{tpu_custom_call.1} parent=1 // pred_region
      %58 = dma.done [#allocation7], 16
    $region37: #{tpu_custom_call.1} parent=1 // pred_fallthru
      _
    %v59 = vld [vmem:[%s0] sm:$0xff]
    %v60 = vld [vmem:[%s0 + $0x8] sm:$0xff]
    %v61 = vld [vmem:[#allocation6] sm:$0x1]
    %v63 = vlaneseq
    %v64 = vshrl.u32 %v63, 7
    %v65 = vsub.s32 0, %v64
    %v66 = vrot.slane %v61, %v65
    %v68 = vmul.f32 %v59, %v66
    %v69 = vmul.f32 %v60, %v66
    %vm70 = vcmask 523264
    %71 = vst.msk [vmem:[#allocation2] sm:$0xff] %vm70, %v68
    %72 = vst.msk [vmem:[#allocation2 + $0x8] sm:$0xff] %vm70, %v69
    %75 = vrot.lane.b32.xlu0 %v59, 126
    %v76 = vpop.permute.xlu0 %75
    %77 = vrot.lane.b32.xlu0 %v60, 126
    %v78 = vpop.permute.xlu0 %77
    %81 = vst.msk [vmem:[#allocation2 + $0x10] sm:$0xff] %vm70, %v76
    %82 = vst.msk [vmem:[#allocation2 + $0x18] sm:$0xff] %vm70, %v78
    %v83 = vld [vmem:[%s0] sm:$0xff]
    %v84 = vld [vmem:[%s0 + $0x8] sm:$0xff]
    %v85 = vld [vmem:[#allocation8] sm:$0x1]
    %v87 = vlaneseq
    %v88 = vshrl.u32 %v87, 7
    %v89 = vsub.s32 0, %v88
    %v90 = vrot.slane %v85, %v89
    %91 = vrot.lane.b32.xlu0 %v90, 4
    %v92 = vpop.permute.xlu0 %91
    %v94 = vmul.f32 %v83, %v92
    %v95 = vmul.f32 %v84, %v92
    %98 = vrot.lane.b32.xlu0 %v94, 124
    %v99 = vpop.permute.xlu0 %98
    %100 = vrot.lane.b32.xlu0 %v95, 124
    %v101 = vpop.permute.xlu0 %100
    %104 = vst.msk [vmem:[#allocation2 + $0x20] sm:$0xff] %vm70, %v99
    %105 = vst.msk [vmem:[#allocation2 + $0x28] sm:$0xff] %vm70, %v101
    %v106 = vld [vmem:[%s4] sm:$0xff]
    %v107 = vld [vmem:[%s4 + $0x8] sm:$0xff]
    %v108 = vld [vmem:[#allocation2] sm:$0xff]
    %v109 = vld [vmem:[#allocation2 + $0x8] sm:$0xff]
    %v110 = vld [vmem:[#allocation2 + $0x10] sm:$0xff]
    %v111 = vld [vmem:[#allocation2 + $0x18] sm:$0xff]
    %v112 = vld [vmem:[#allocation2 + $0x20] sm:$0xff]
    %v113 = vld [vmem:[#allocation2 + $0x28] sm:$0xff]
    %v114 = vld [vmem:[%s5] sm:$0xff]
    %v115 = vld [vmem:[%s5 + $0x8] sm:$0xff]
    %117 = vset.pattern.permute.xlu0 0
    %118 = vperm.xlu0 %117, %v114
    %v119 = vpop.permute.xlu0 %118
    %122 = vset.pattern.permute.xlu0 0
    %123 = vperm.xlu0 %122, %v115
    %v124 = vpop.permute.xlu0 %123
    %vm126 = vcmask 392192
    %v128 = vsel %vm126, %v106, 0
    %v131 = vsel %vm126, %v107, 0
    %133 = vmatprep.subr.mxu0 0.0
    %134 = vmatpush1.msra.mxu0 %v108
    %135 = vmatprep.subr.mxu0 0.0
    %136 = vmatpush1.msra.mxu0 %v109
    %137 = vmatprep.subr.mxu0 0.0
    %138 = vmatpush1.msra.mxu0 %v110
    %139 = vmatprep.subr.mxu0 0.0
    %140 = vmatpush1.msra.mxu0 %v111
    %141 = vmatprep.subr.mxu0 0.0
    %142 = vmatpush1.msra.mxu0 %v112
    %143 = vmatprep.subr.mxu0 0.0
    %144 = vmatpush1.msra.mxu0 %v113
    %145 = vmatprep.subr.mxu0 0.0
    %146 = vmatpush1.msra.mxu0 0.0
    %147 = vmatprep.subr.mxu0 0.0
    %148 = vmatpush1.msra.mxu0 0.0
    %149 = vmatprep.subr.mxu0 0.0
    %150 = vmatpush1.msra.mxu0 0.0
    %151 = vmatprep.subr.mxu0 0.0
    %152 = vmatpush1.msra.mxu0 0.0
    %153 = vmatprep.subr.mxu0 0.0
    %154 = vmatpush1.msra.mxu0 0.0
    %155 = vmatprep.subr.mxu0 0.0
    %156 = vmatpush1.msra.mxu0 0.0
    %157 = vmatprep.subr.mxu0 0.0
    %158 = vmatpush1.msra.mxu0 0.0
    %159 = vmatprep.subr.mxu0 0.0
    %160 = vmatpush1.msra.mxu0 0.0
    %161 = vmatprep.subr.mxu0 0.0
    %162 = vmatpush1.msra.mxu0 0.0
    %163 = vmatprep.subr.mxu0 0.0
    %164 = vmatpush1.msra.mxu0 0.0
    %165 = vmatprep.subr.mxu0 0.0
    %166 = vmatpush1.msra.mxu0 0.0
    %167 = vmatprep.subr.mxu0 0.0
    %168 = vmatpush1.msra.mxu0 0.0
    %169 = vmatprep.subr.mxu0 0.0
    %170 = vmatpush1.msra.mxu0 0.0
    %171 = vmatprep.subr.mxu0 0.0
    %172 = vmatpush1.msra.mxu0 0.0
    %173 = vmatprep.subr.mxu0 0.0
    %174 = vmatpush1.msra.mxu0 0.0
    %175 = vmatprep.subr.mxu0 0.0
    %176 = vmatpush1.msra.mxu0 0.0
    %177 = vmatprep.subr.mxu0 0.0
    %178 = vmatpush1.msra.mxu0 0.0
    %179 = vmatprep.subr.mxu0 0.0
    %180 = vmatpush1.msra.mxu0 0.0
    %181 = vmatprep.subr.mxu0 0.0
    %182 = vmatpush1.msra.mxu0 0.0
    %183 = vmatprep.subr.mxu0 0.0
    %184 = vmatpush1.msra.mxu0 0.0
    %185 = vmatprep.subr.mxu0 0.0
    %186 = vmatpush1.msra.mxu0 0.0
    %187 = vmatprep.subr.mxu0 0.0
    %188 = vmatpush1.msra.mxu0 0.0
    %189 = vmatprep.subr.mxu0 0.0
    %190 = vmatpush1.msra.mxu0 0.0
    %191 = vmatprep.subr.mxu0 0.0
    %192 = vmatpush1.msra.mxu0 0.0
    %193 = vmatprep.subr.mxu0 0.0
    %194 = vmatpush1.msra.mxu0 0.0
    %195 = vmatprep.subr.mxu0 0.0
    %196 = vmatpush1.msra.mxu0 0.0
    %197 = vmatprep.mubr.f32.mxu0 0.0
    %198 = vmatmul.mubr.f32.gmra.mrb[0].mxu0 %v128
    %v199 = vpop.f32.mrb[0].mxu0
    %v200 = vadd.f32 %v119, %v199
    %v201 = vpop.f32.mrb[0].mxu0
    %202 = vmatprep.mubr.f32.mxu0 0.0
    %203 = vmatmul.mubr.f32.gmra.mrb[0].mxu0 %v131
    %v204 = vpop.f32.mrb[0].mxu0
    %v205 = vadd.f32 %v124, %v204
    %v206 = vpop.f32.mrb[0].mxu0
    %207 = vdwg.mxu0
    %v208 = vmax.f32 %v200, 0.0
    %v209 = vmax.f32 %v205, 0.0
    %v210 = vadd.f32 %v208, %v76
    %v211 = vadd.f32 %v209, %v78
    %v212 = vld [vmem:[#allocation3] sm:$0x1]
    %v214 = vlaneseq
    %v215 = vshrl.u32 %v214, 7
    %v216 = vsub.s32 0, %v215
    %v217 = vrot.slane %v212, %v216
    %v219 = vmul.f32 %v210, %v217
    %v220 = vmul.f32 %v211, %v217
    %221 = vst.msk [vmem:[#allocation9] sm:$0xff] %vm70, %v219
    %222 = vst.msk [vmem:[#allocation9 + $0x8] sm:$0xff] %vm70, %v220
    // Predicated region
    $region38: #{tpu_custom_call.1} parent=1 // pred_check
      _
    $region39: #{tpu_custom_call.1} parent=1 // pred_check_branch
      %224 = sbr.rel (0) target = $region41
    $region40: #{tpu_custom_call.1} parent=1 // pred_region
      %s226 = ssub.s32 256, 256
      %227 = vsyncadd [#allocation5], %s226
      %s228 = sshll.u32 [#allocation9], 4
      %s229 = int_to_ptr.vmem [resolvable:$true] %s228
      %234 = dma.vmem_to_hbm [thread:$0]  %s229, 256, %s6, [#allocation5], 128, 128, 8
    $region41: #{tpu_custom_call.1} parent=1 // pred_fallthru
      _
    // Predicated region
    $region42: #{tpu_custom_call.1} parent=1 // pred_check
      _
    $region43: #{tpu_custom_call.1} parent=1 // pred_check_branch
      %236 = sbr.rel (0) target = $region45
    $region44: #{tpu_custom_call.1} parent=1 // pred_region
      %237 = dma.done [#allocation5], 256
    $region45: #{tpu_custom_call.1} parent=1 // pred_fallthru
      _
    %238 = vsyncpa [#allocation4], 1
    %239 = vsyncpa [#allocation7], 1
    %240 = vsyncpa [#allocation5], 1

</llo_original>
